<compile_context>
chip_gen: v5e
topology: v5e:2x2
jax: 0.10.0
libtpu: 0.0.40
codegen_flags: <defaults>
</compile_context>

<pallas_src>
import math

import jax
import jax.numpy as jnp
from jax.experimental import pallas as pl
from jax.experimental.pallas import tpu as pltpu


def _round_up(x, m):
    return ((x + m - 1) // m) * m


def _mlp_kernel(z_ref, *refs):
    """Fused MLP: Lin (ReLU Lin)* then sigmoid. Weights/biases are VMEM-resident."""
    out_ref = refs[-1]
    wb = refs[:-1]
    n_layers = len(wb) // 2

    h = z_ref[...]  # bf16 (TM, K)
    for i in range(n_layers):
        w_ref = wb[2 * i]
        b_ref = wb[2 * i + 1]
        if i > 0:
            # ReLU in f32, back to bf16 for the MXU.
            h = jnp.maximum(h, 0.0).astype(jnp.bfloat16)
        h = jnp.dot(h, w_ref[...], preferred_element_type=jnp.float32) + b_ref[...]

    # last_activation = 'sigmoid' (f32)
    out_ref[...] = jax.nn.sigmoid(h)


def init_mlp_params(key, latent_size, hidden_size, output_size, nlayers):
    """Deterministic synthetic init of the MLP's linear layers.

    Returns a list of (W, b) with W shape (in, out), b shape (1, out).
    Structure: Linear(latent, hidden) [ReLU Linear(hidden, hidden)]*(nlayers-2)
               ReLU Linear(hidden, output)
    """
    assert nlayers >= 1
    if nlayers == 1:
        dims = [(latent_size, output_size)]
    else:
        dims = [(latent_size, hidden_size)]
        dims += [(hidden_size, hidden_size)] * (nlayers - 2)
        dims += [(hidden_size, output_size)]

    params = []
    for d_in, d_out in dims:
        key, kw, kb = jax.random.split(key, 3)
        scale = 1.0 / jnp.sqrt(jnp.float32(d_in))
        w = jax.random.normal(kw, (d_in, d_out), jnp.float32) * scale
        b = jax.random.normal(kb, (1, d_out), jnp.float32) * 0.01
        params.append((w, b))
    return params


def mlp_decoder_forward(z1, z2, params, *, mixing, output_shape, max_tile_m=256):
    """MLPDecoder.forward: mixing + MLP + sigmoid, reshaped to (batch, *output_shape)."""
    # --- mixing (cheap lane-level XLA op; keeps the kernel a single-z MLP).
    if mixing == "concat":
        z = jnp.concatenate([z1, z2], axis=1)
    else:
        assert z1.shape == z2.shape, "elementwise-product mixing requires z1.shape == z2.shape"
        z = z1 * z2

    batch, latent = z.shape
    out_size = math.prod(output_shape)
    assert params[-1][0].shape[1] == out_size

    # --- zero-pad feature dims to lane multiples of 128 (exact: padded activation
    #     lanes are 0 after matmul + 0-bias and stay 0 through ReLU).
    out_dims = [w.shape[1] for (w, _) in params]
    out_pads = [_round_up(d, 128) for d in out_dims]
    in_dims = [latent] + out_dims[:-1]
    in_pads = [latent] + out_pads[:-1]

    flat = []
    for (w, b), d_in, d_out, p_in, p_out in zip(params, in_dims, out_dims, in_pads, out_pads):
        w_p = jnp.zeros((p_in, p_out), jnp.bfloat16).at[:d_in, :d_out].set(w.astype(jnp.bfloat16))
        b_p = jnp.zeros((1, p_out), jnp.float32).at[:, :d_out].set(b.astype(jnp.float32))
        flat += [w_p, b_p]

    # --- pad batch to a sublane/tile multiple; grid over batch tiles.
    tm = min(max_tile_m, _round_up(batch, 8))
    m_pad = _round_up(batch, tm)
    z_p = jnp.zeros((m_pad, latent), jnp.bfloat16).at[:batch, :].set(z.astype(jnp.bfloat16))

    out_pad = out_pads[-1]
    grid = (m_pad // tm,)

    in_specs = [pl.BlockSpec((tm, latent), lambda i: (i, 0))]
    for arr in flat:
        # Constant index_map -> weights/biases stay resident in VMEM across the grid.
        in_specs.append(pl.BlockSpec(arr.shape, lambda i: (0, 0)))
    out_specs = pl.BlockSpec((tm, out_pad), lambda i: (i, 0))

    flops = 2 * m_pad * sum(p_in * p_out for p_in, p_out in zip(in_pads, out_pads))
    bytes_accessed = (
        z_p.size * z_p.dtype.itemsize
        + sum(a.size * a.dtype.itemsize for a in flat)
        + m_pad * out_pad * 4
    )
    cost = pl.CostEstimate(
        flops=flops, transcendentals=m_pad * out_pad, bytes_accessed=bytes_accessed
    )

    x_pad = pl.pallas_call(
        _mlp_kernel,
        out_shape=jax.ShapeDtypeStruct((m_pad, out_pad), jnp.float32),
        grid=grid,
        in_specs=in_specs,
        out_specs=out_specs,
        compiler_params=pltpu.CompilerParams(
            dimension_semantics=("parallel",),   # batch tiles are independent (v7x megacore)
            vmem_limit_bytes=32 * 1024 * 1024,   # safe on v5e/v6e/v7x; working set << 32 MiB
        ),
        cost_estimate=cost,
    )(z_p, *flat)

    # Strip batch/out padding, reshape like PyTorch's x.view([-1] + output_shape).
    return x_pad[:batch, :out_size].reshape((-1,) + tuple(output_shape))


def _reference_forward(z1, z2, params, *, mixing, output_shape):
    """Pure-JAX f32 reference mirroring the PyTorch semantics."""
    if mixing == "concat":
        z = jnp.concatenate([z1, z2], axis=1)
    else:
        z = z1 * z2
    h = z
    for i, (w, b) in enumerate(params):
        if i > 0:
            h = jnp.maximum(h, 0.0)
        h = h @ w + b
    h = jax.nn.sigmoid(h)
    return h.reshape((-1,) + tuple(output_shape))


if __name__ == "__main__":
    # Module config (synthetic): latent_size = 16 + 16 = 32 for 'concat',
    # hidden_size = 64, output_shape = [4, 16, 16], nlayers = 3, last_activation='sigmoid'.
    batch = 2
    z1_dim, z2_dim = 16, 16
    hidden_size = 64
    output_shape = [4, 16, 16]
    nlayers = 3
    out_size = output_shape[0] * output_shape[1] * output_shape[2]

    key = jax.random.PRNGKey(0)
    k_z1, k_z2, k_pc, k_pp = jax.random.split(key, 4)
    z1 = jax.random.normal(k_z1, (batch, z1_dim), jnp.float32)
    z2 = jax.random.normal(k_z2, (batch, z2_dim), jnp.float32)

    # mixing='concat'
    params_c = init_mlp_params(k_pc, z1_dim + z2_dim, hidden_size, out_size, nlayers)
    out_c = mlp_decoder_forward(z1, z2, params_c, mixing="concat", output_shape=output_shape)
    out_c = jax.block_until_ready(out_c)
    ref_c = _reference_forward(z1, z2, params_c, mixing="concat", output_shape=output_shape)
    assert out_c.shape == (batch, *output_shape), out_c.shape
    assert jnp.allclose(out_c, ref_c, atol=2e-2, rtol=2e-2), "concat mixing mismatch vs reference"

    # mixing='product' (elementwise)
    params_p = init_mlp_params(k_pp, z1_dim, hidden_size, out_size, nlayers)
    out_p = mlp_decoder_forward(z1, z2, params_p, mixing="product", output_shape=output_shape)
    out_p = jax.block_until_ready(out_p)
    ref_p = _reference_forward(z1, z2, params_p, mixing="product", output_shape=output_shape)
    assert out_p.shape == (batch, *output_shape), out_p.shape
    assert jnp.allclose(out_p, ref_p, atol=2e-2, rtol=2e-2), "product mixing mismatch vs reference"

    print("KERNEL_OK")
</pallas_src>

<mosaic_0001>
module attributes {stable_mosaic.version = 11 : i64} {
  func.func @_mlp_kernel(%arg0: i32, %arg1: memref<8x32xbf16, #tpu.memory_space<vmem>>, %arg2: memref<32x128xbf16, #tpu.memory_space<vmem>>, %arg3: memref<1x128xf32, #tpu.memory_space<vmem>>, %arg4: memref<128x128xbf16, #tpu.memory_space<vmem>>, %arg5: memref<1x128xf32, #tpu.memory_space<vmem>>, %arg6: memref<128x1024xbf16, #tpu.memory_space<vmem>>, %arg7: memref<1x1024xf32, #tpu.memory_space<vmem>>, %arg8: memref<8x1024xf32, #tpu.memory_space<vmem>>) attributes {dimension_semantics = [#tpu.dimension_semantics<parallel>], iteration_bounds = array<i64: 1>, scalar_prefetch = 0 : i64, scratch_operands = 0 : i64, tpu.core_type = #tpu.core_type<tc>, window_params = [{transform_indices = @transform_0, window_bounds = array<i64: 8, 32>}, {pipeline_mode = #tpu.pipeline_mode<synchronous>, transform_indices = @transform_1, window_bounds = array<i64: 32, 128>}, {pipeline_mode = #tpu.pipeline_mode<synchronous>, transform_indices = @transform_2, window_bounds = array<i64: 1, 128>}, {pipeline_mode = #tpu.pipeline_mode<synchronous>, transform_indices = @transform_3, window_bounds = array<i64: 128, 128>}, {pipeline_mode = #tpu.pipeline_mode<synchronous>, transform_indices = @transform_4, window_bounds = array<i64: 1, 128>}, {pipeline_mode = #tpu.pipeline_mode<synchronous>, transform_indices = @transform_5, window_bounds = array<i64: 128, 1024>}, {pipeline_mode = #tpu.pipeline_mode<synchronous>, transform_indices = @transform_6, window_bounds = array<i64: 1, 1024>}, {transform_indices = @transform_7, window_bounds = array<i64: 8, 1024>}]} {
    %c0 = arith.constant 0 : index
    %c0_0 = arith.constant 0 : index
    %0 = vector.load %arg1[%c0, %c0_0] : memref<8x32xbf16, #tpu.memory_space<vmem>>, vector<8x32xbf16>
    %c0_1 = arith.constant 0 : index
    %c0_2 = arith.constant 0 : index
    %1 = vector.load %arg2[%c0_1, %c0_2] : memref<32x128xbf16, #tpu.memory_space<vmem>>, vector<32x128xbf16>
    %cst = arith.constant dense<0.000000e+00> : vector<8x128xf32>
    %2 = tpu.matmul %0, %1, %cst {dimension_numbers = #tpu.dot_dimension_numbers<[1], [0], [0], [1], [0, 0, 1, 1], [], []>} : vector<8x32xbf16>, vector<32x128xbf16>, vector<8x128xf32> -> vector<8x128xf32>
    %c0_3 = arith.constant 0 : index
    %c0_4 = arith.constant 0 : index
    %3 = vector.load %arg3[%c0_3, %c0_4] : memref<1x128xf32, #tpu.memory_space<vmem>>, vector<1x128xf32>
    %4 = vector.broadcast %3 : vector<1x128xf32> to vector<8x128xf32>
    %5 = arith.addf %2, %4 : vector<8x128xf32>
    %cst_5 = arith.constant 0.000000e+00 : f32
    %6 = vector.broadcast %cst_5 : f32 to vector<8x128xf32>
    %7 = arith.maximumf %5, %6 : vector<8x128xf32>
    %8 = arith.truncf %7 : vector<8x128xf32> to vector<8x128xbf16>
    %c0_6 = arith.constant 0 : index
    %c0_7 = arith.constant 0 : index
    %9 = vector.load %arg4[%c0_6, %c0_7] : memref<128x128xbf16, #tpu.memory_space<vmem>>, vector<128x128xbf16>
    %cst_8 = arith.constant dense<0.000000e+00> : vector<8x128xf32>
    %10 = tpu.matmul %8, %9, %cst_8 {dimension_numbers = #tpu.dot_dimension_numbers<[1], [0], [0], [1], [0, 0, 1, 1], [], []>} : vector<8x128xbf16>, vector<128x128xbf16>, vector<8x128xf32> -> vector<8x128xf32>
    %c0_9 = arith.constant 0 : index
    %c0_10 = arith.constant 0 : index
    %11 = vector.load %arg5[%c0_9, %c0_10] : memref<1x128xf32, #tpu.memory_space<vmem>>, vector<1x128xf32>
    %12 = vector.broadcast %11 : vector<1x128xf32> to vector<8x128xf32>
    %13 = arith.addf %10, %12 : vector<8x128xf32>
    %cst_11 = arith.constant 0.000000e+00 : f32
    %14 = vector.broadcast %cst_11 : f32 to vector<8x128xf32>
    %15 = arith.maximumf %13, %14 : vector<8x128xf32>
    %16 = arith.truncf %15 : vector<8x128xf32> to vector<8x128xbf16>
    %c0_12 = arith.constant 0 : index
    %c0_13 = arith.constant 0 : index
    %17 = vector.load %arg6[%c0_12, %c0_13] : memref<128x1024xbf16, #tpu.memory_space<vmem>>, vector<128x1024xbf16>
    %cst_14 = arith.constant dense<0.000000e+00> : vector<8x1024xf32>
    %18 = tpu.matmul %16, %17, %cst_14 {dimension_numbers = #tpu.dot_dimension_numbers<[1], [0], [0], [1], [0, 0, 1, 1], [], []>} : vector<8x128xbf16>, vector<128x1024xbf16>, vector<8x1024xf32> -> vector<8x1024xf32>
    %c0_15 = arith.constant 0 : index
    %c0_16 = arith.constant 0 : index
    %19 = vector.load %arg7[%c0_15, %c0_16] : memref<1x1024xf32, #tpu.memory_space<vmem>>, vector<1x1024xf32>
    %20 = vector.broadcast %19 : vector<1x1024xf32> to vector<8x1024xf32>
    %21 = arith.addf %18, %20 : vector<8x1024xf32>
    %22 = arith.negf %21 : vector<8x1024xf32>
    %23 = math.exp %22 : vector<8x1024xf32>
    %cst_17 = arith.constant 1.000000e+00 : f32
    %24 = vector.broadcast %cst_17 : f32 to vector<8x1024xf32>
    %25 = arith.addf %24, %23 : vector<8x1024xf32>
    %26 = arith.divf %24, %25 : vector<8x1024xf32>
    %c0_18 = arith.constant 0 : index
    %c0_19 = arith.constant 0 : index
    %27 = vector.load %arg8[%c0_18, %c0_19] : memref<8x1024xf32, #tpu.memory_space<vmem>>, vector<8x1024xf32>
    tpu.vector_store %arg8[%c0_18, %c0_19], %26 {strides = array<i32>} : memref<8x1024xf32, #tpu.memory_space<vmem>>, vector<8x1024xf32>,
    return
  }
  func.func @transform_0(%arg0: i32) -> (i32, i32) {
    %c0_i32 = arith.constant 0 : i32
    %c0_i32_0 = arith.constant 0 : i32
    return %arg0, %c0_i32 : i32, i32
  }
  func.func @transform_1(%arg0: i32) -> (i32, i32) {
    %c0_i32 = arith.constant 0 : i32
    %c0_i32_0 = arith.constant 0 : i32
    %c0_i32_1 = arith.constant 0 : i32
    return %c0_i32, %c0_i32_0 : i32, i32
  }
  func.func @transform_2(%arg0: i32) -> (i32, i32) {
    %c0_i32 = arith.constant 0 : i32
    %c0_i32_0 = arith.constant 0 : i32
    %c0_i32_1 = arith.constant 0 : i32
    return %c0_i32, %c0_i32_0 : i32, i32
  }
  func.func @transform_3(%arg0: i32) -> (i32, i32) {
    %c0_i32 = arith.constant 0 : i32
    %c0_i32_0 = arith.constant 0 : i32
    %c0_i32_1 = arith.constant 0 : i32
    return %c0_i32, %c0_i32_0 : i32, i32
  }
  func.func @transform_4(%arg0: i32) -> (i32, i32) {
    %c0_i32 = arith.constant 0 : i32
    %c0_i32_0 = arith.constant 0 : i32
    %c0_i32_1 = arith.constant 0 : i32
    return %c0_i32, %c0_i32_0 : i32, i32
  }
  func.func @transform_5(%arg0: i32) -> (i32, i32) {
    %c0_i32 = arith.constant 0 : i32
    %c0_i32_0 = arith.constant 0 : i32
    %c0_i32_1 = arith.constant 0 : i32
    return %c0_i32, %c0_i32_0 : i32, i32
  }
  func.func @transform_6(%arg0: i32) -> (i32, i32) {
    %c0_i32 = arith.constant 0 : i32
    %c0_i32_0 = arith.constant 0 : i32
    %c0_i32_1 = arith.constant 0 : i32
    return %c0_i32, %c0_i32_0 : i32, i32
  }
  func.func @transform_7(%arg0: i32) -> (i32, i32) {
    %c0_i32 = arith.constant 0 : i32
    %c0_i32_0 = arith.constant 0 : i32
    return %arg0, %c0_i32 : i32, i32
  }
}

</mosaic_0001>

<llo_original>
// kernel: tpu_custom_call.1
$region0: #{tpu_custom_call.1}
  #allocation0 [shape = 'u32[]', space=smem, size = 0x4, offset = 0x4, fixed_abs, tag = 'smem constant byte address 0x4 - core index']
  #allocation1 [shape = 'u32[72,128]{1,0:T(1,128)}', space=vmem, size = 0x9000, scoped, tag = 'internal scratch']
  %s0 = inlined_call_operand.hbm [shape: bf16[8,32], index: 0, kind: input, shape index: {}]
  %s1 = inlined_call_operand.hbm [shape: bf16[32,128], index: 1, kind: input, shape index: {}]
  %s2 = inlined_call_operand.vmem [shape: f32[1,128], index: 2, kind: input, shape index: {}]
  %s3 = inlined_call_operand.hbm [shape: bf16[128,128], index: 3, kind: input, shape index: {}]
  %s4 = inlined_call_operand.vmem [shape: f32[1,128], index: 4, kind: input, shape index: {}]
  %s5 = inlined_call_operand.hbm [shape: bf16[128,1024], index: 5, kind: input, shape index: {}]
  %s6 = inlined_call_operand.hbm [shape: f32[1,1024], index: 6, kind: input, shape index: {}]
  %s7 = inlined_call_operand.hbm [shape: f32[8,1024], index: 7, kind: output, shape index: {}]
  %s8 = sld [smem:[#allocation0]]
  $region58: #{tpu_custom_call.1} parent=0
    _
  %s10 = ssub.s32 1, %s8
  %s11 = scalar_select 0, %s10, %s8
  $region1: #{tpu_custom_call.1} parent=0
    #allocation2 [shape = 'u8[2048]{0}', space=vmem, size = 0x800, scoped, tag = 'input window, operand 0, single buffered']
    #allocation3 [shape = 's32[1]{0}', space=sflag, size = 0x4, scoped, tag = 'scoped memory for tpu_custom_call.1']
    #allocation4 [shape = 's32[1]{0}', space=sflag, size = 0x4, scoped, tag = 'scoped memory for tpu_custom_call.1']
    #allocation5 [shape = 'u8[8192]{0}', space=vmem, size = 0x2000, scoped, tag = 'input window, operand 1, single buffered']
    #allocation6 [shape = 's32[1]{0}', space=sflag, size = 0x4, scoped, tag = 'scoped memory for tpu_custom_call.1']
    #allocation7 [shape = 'u8[32768]{0}', space=vmem, size = 0x8000, scoped, tag = 'input window, operand 3, single buffered']
    #allocation8 [shape = 'u8[262144]{0}', space=vmem, size = 0x40000, scoped, tag = 'input window, operand 5, single buffered']
    #allocation9 [shape = 's32[1]{0}', space=sflag, size = 0x4, scoped, tag = 'scoped memory for tpu_custom_call.1']
    #allocation10 [shape = 'u8[4096]{0}', space=vmem, size = 0x1000, scoped, tag = 'input window, operand 6, single buffered']
    #allocation11 [shape = 'u8[32768]{0}', space=vmem, size = 0x8000, scoped, tag = 'output window, operand 0, single buffered']
    %12 = vsyncpa [#allocation3], 0
    %13 = vsyncpa [#allocation6], 0
    %14 = vsyncpa [#allocation9], 0
    %15 = vsyncpa [#allocation4], 0
    // Predicated region
    $region2: #{tpu_custom_call.1} parent=1 // pred_check
      _
    $region3: #{tpu_custom_call.1} parent=1 // pred_check_branch
      %17 = sbr.rel (0) target = $region5
    $region4: #{tpu_custom_call.1} parent=1 // pred_region
      %19 = vsyncadd [#allocation3], 0
      %s21 = sshll.u32 %s0, 4
      %s22 = int_to_ptr.hbm [resolvable:$true] %s21
      %s23 = sshll.u32 [#allocation2], 4
      %s24 = int_to_ptr.vmem [resolvable:$true] %s23
      %26 = dma.hbm_to_vmem [thread:$0]  %s22, 64, %s24, [#allocation3]
    $region5: #{tpu_custom_call.1} parent=1 // pred_fallthru
      _
    // Predicated region
    $region6: #{tpu_custom_call.1} parent=1 // pred_check
      _
    $region7: #{tpu_custom_call.1} parent=1 // pred_check_branch
      %28 = sbr.rel (0) target = $region9
    $region8: #{tpu_custom_call.1} parent=1 // pred_region
      %30 = vsyncadd [#allocation6], 0
      %s31 = sshll.u32 %s1, 4
      %s32 = int_to_ptr.hbm [resolvable:$true] %s31
      %s33 = sshll.u32 [#allocation5], 4
      %s34 = int_to_ptr.vmem [resolvable:$true] %s33
      %39 = dma.hbm_to_vmem [thread:$0]  %s32, 256, %s34, [#allocation6], 64, 64, 4
    $region9: #{tpu_custom_call.1} parent=1 // pred_fallthru
      _
    // Predicated region
    $region10: #{tpu_custom_call.1} parent=1 // pred_check
      _
    $region11: #{tpu_custom_call.1} parent=1 // pred_check_branch
      %41 = sbr.rel (0) target = $region13
    $region12: #{tpu_custom_call.1} parent=1 // pred_region
      _
    $region13: #{tpu_custom_call.1} parent=1 // pred_fallthru
      _
    // Predicated region
    $region14: #{tpu_custom_call.1} parent=1 // pred_check
      _
    $region15: #{tpu_custom_call.1} parent=1 // pred_check_branch
      %43 = sbr.rel (0) target = $region17
    $region16: #{tpu_custom_call.1} parent=1 // pred_region
      %45 = vsyncadd [#allocation6], 0
      %s46 = sshll.u32 %s3, 4
      %s47 = int_to_ptr.hbm [resolvable:$true] %s46
      %s48 = sshll.u32 [#allocation7], 4
      %s49 = int_to_ptr.vmem [resolvable:$true] %s48
      %54 = dma.hbm_to_vmem [thread:$0]  %s47, 1024, %s49, [#allocation6], 64, 64, 4
    $region17: #{tpu_custom_call.1} parent=1 // pred_fallthru
      _
    // Predicated region
    $region18: #{tpu_custom_call.1} parent=1 // pred_check
      _
    $region19: #{tpu_custom_call.1} parent=1 // pred_check_branch
      %56 = sbr.rel (0) target = $region21
    $region20: #{tpu_custom_call.1} parent=1 // pred_region
      _
    $region21: #{tpu_custom_call.1} parent=1 // pred_fallthru
      _
    // Predicated region
    $region22: #{tpu_custom_call.1} parent=1 // pred_check
      _
    $region23: #{tpu_custom_call.1} parent=1 // pred_check_branch
      %58 = sbr.rel (0) target = $region25
    $region24: #{tpu_custom_call.1} parent=1 // pred_region
      %60 = vsyncadd [#allocation9], 0
      %s61 = sshll.u32 %s5, 4
      %s62 = int_to_ptr.hbm [resolvable:$true] %s61
      %s63 = sshll.u32 [#allocation8], 4
      %s64 = int_to_ptr.vmem [resolvable:$true] %s63
      %69 = dma.hbm_to_vmem [thread:$0]  %s62, 8192, %s64, [#allocation9], 512, 512, 32
    $region25: #{tpu_custom_call.1} parent=1 // pred_fallthru
      _
    // Predicated region
    $region26: #{tpu_custom_call.1} parent=1 // pred_check
      _
    $region27: #{tpu_custom_call.1} parent=1 // pred_check_branch
      %71 = sbr.rel (0) target = $region29
    $region28: #{tpu_custom_call.1} parent=1 // pred_region
      %73 = vsyncadd [#allocation9], 0
      %s75 = sshll.u32 %s6, 4
      %s76 = int_to_ptr.hbm [resolvable:$true] %s75
      %s77 = sshll.u32 [#allocation10], 4
      %s78 = int_to_ptr.vmem [resolvable:$true] %s77
      %80 = dma.hbm_to_vmem [thread:$0]  %s76, 128, %s78, [#allocation9]
    $region29: #{tpu_custom_call.1} parent=1 // pred_fallthru
      _
    // Predicated region
    $region30: #{tpu_custom_call.1} parent=1 // pred_check
      _
    $region31: #{tpu_custom_call.1} parent=1 // pred_check_branch
      %82 = sbr.rel (0) target = $region33
    $region32: #{tpu_custom_call.1} parent=1 // pred_region
      %84 = dma.done [#allocation3], 64
    $region33: #{tpu_custom_call.1} parent=1 // pred_fallthru
      _
    // Predicated region
    $region34: #{tpu_custom_call.1} parent=1 // pred_check
      _
    $region35: #{tpu_custom_call.1} parent=1 // pred_check_branch
      %86 = sbr.rel (0) target = $region37
    $region36: #{tpu_custom_call.1} parent=1 // pred_region
      %88 = dma.done [#allocation6], 256
    $region37: #{tpu_custom_call.1} parent=1 // pred_fallthru
      _
    // Predicated region
    $region38: #{tpu_custom_call.1} parent=1 // pred_check
      _
    $region39: #{tpu_custom_call.1} parent=1 // pred_check_branch
      %90 = sbr.rel (0) target = $region41
    $region40: #{tpu_custom_call.1} parent=1 // pred_region
      %92 = dma.done [#allocation6], 1024
    $region41: #{tpu_custom_call.1} parent=1 // pred_fallthru
      _
    // Predicated region
    $region42: #{tpu_custom_call.1} parent=1 // pred_check
      _
    $region43: #{tpu_custom_call.1} parent=1 // pred_check_branch
      %94 = sbr.rel (0) target = $region45
    $region44: #{tpu_custom_call.1} parent=1 // pred_region
      %96 = dma.done [#allocation9], 8192
    $region45: #{tpu_custom_call.1} parent=1 // pred_fallthru
      _
    // Predicated region
    $region46: #{tpu_custom_call.1} parent=1 // pred_check
      _
    $region47: #{tpu_custom_call.1} parent=1 // pred_check_branch
      %98 = sbr.rel (0) target = $region49
    $region48: #{tpu_custom_call.1} parent=1 // pred_region
      %100 = dma.done [#allocation9], 128
    $region49: #{tpu_custom_call.1} parent=1 // pred_fallthru
      _
    %v102 = vld [vmem:[#allocation2] sm:$0xf]
    %v103 = vld [vmem:[#allocation5] sm:$0xf]
    %v104 = vld [vmem:[#allocation5 + $0x4] sm:$0xf]
    %v105 = vld [vmem:[#allocation5 + $0x8] sm:$0xf]
    %v106 = vld [vmem:[#allocation5 + $0xc] sm:$0xf]
    %v107 = vld [vmem:[%s2] sm:$0x1]
    %v109 = vperm.slane %v107, 0
    %v115 = vunpack.c.l.b16 %v103
    %v116 = vunpack.c.l.b16 %v104
    %v117 = vunpack.c.l.b16 %v105
    %v118 = vunpack.c.l.b16 %v106
    %v119 = vpack.c.b16 %v116, %v115
    %v120 = vpack.c.b16 %v118, %v117
    %vm123 = vcmask 261120
    %v125 = vsel %vm123, %v102, 0
    %127 = vmatpush.bf16.msra.mxu0 0
    %128 = vmatpush.bf16.msra.mxu0 0
    %129 = vmatpush.bf16.msra.mxu0 0
    %130 = vmatpush.bf16.msra.mxu0 0
    %131 = vmatpush.bf16.msra.mxu0 0
    %132 = vmatpush.bf16.msra.mxu0 0
    %133 = vmatpush.bf16.msra.mxu0 %v120
    %134 = vmatpush.bf16.msra.mxu0 %v119
    %135 = vmatmul.bf16.gmra.mxu0 %v125
    %v136 = vpop.f32.mrf.mxu0
    %v137 = vadd.f32 %v109, %v136
    %v138 = vpop.f32.mrf.mxu0
    %139 = vdwg.mxu0
    %v140 = vmax.f32 %v137, 0.0
    %v141 = vpack.c.bf16 %v140, %v140
    %v142 = vld [vmem:[#allocation7] sm:$0xf]
    %v143 = vld [vmem:[#allocation7 + $0x4] sm:$0xf]
    %v144 = vld [vmem:[#allocation7 + $0x8] sm:$0xf]
    %v145 = vld [vmem:[#allocation7 + $0xc] sm:$0xf]
    %v146 = vld [vmem:[#allocation7 + $0x10] sm:$0xf]
    %v147 = vld [vmem:[#allocation7 + $0x14] sm:$0xf]
    %v148 = vld [vmem:[#allocation7 + $0x18] sm:$0xf]
    %v149 = vld [vmem:[#allocation7 + $0x1c] sm:$0xf]
    %v150 = vld [vmem:[#allocation7 + $0x20] sm:$0xf]
    %v151 = vld [vmem:[#allocation7 + $0x24] sm:$0xf]
    %v152 = vld [vmem:[#allocation7 + $0x28] sm:$0xf]
    %v153 = vld [vmem:[#allocation7 + $0x2c] sm:$0xf]
    %v154 = vld [vmem:[#allocation7 + $0x30] sm:$0xf]
    %v155 = vld [vmem:[#allocation7 + $0x34] sm:$0xf]
    %v156 = vld [vmem:[#allocation7 + $0x38] sm:$0xf]
    %v157 = vld [vmem:[#allocation7 + $0x3c] sm:$0xf]
    %v158 = vld [vmem:[%s4] sm:$0x1]
    %v160 = vperm.slane %v158, 0
    %v178 = vunpack.c.l.b16 %v142
    %v179 = vunpack.c.l.b16 %v143
    %v180 = vunpack.c.l.b16 %v144
    %v181 = vunpack.c.l.b16 %v145
    %v182 = vunpack.c.l.b16 %v146
    %v183 = vunpack.c.l.b16 %v147
    %v184 = vunpack.c.l.b16 %v148
    %v185 = vunpack.c.l.b16 %v149
    %v186 = vunpack.c.l.b16 %v150
    %v187 = vunpack.c.l.b16 %v151
    %v188 = vunpack.c.l.b16 %v152
    %v189 = vunpack.c.l.b16 %v153
    %v190 = vunpack.c.l.b16 %v154
    %v191 = vunpack.c.l.b16 %v155
    %v192 = vunpack.c.l.b16 %v156
    %v193 = vunpack.c.l.b16 %v157
    %v194 = vpack.c.b16 %v179, %v178
    %v195 = vpack.c.b16 %v181, %v180
    %v196 = vpack.c.b16 %v183, %v182
    %v197 = vpack.c.b16 %v185, %v184
    %v198 = vpack.c.b16 %v187, %v186
    %v199 = vpack.c.b16 %v189, %v188
    %v200 = vpack.c.b16 %v191, %v190
    %v201 = vpack.c.b16 %v193, %v192
    %210 = vmatpush.bf16.msra.mxu0 %v201
    %211 = vmatpush.bf16.msra.mxu0 %v200
    %212 = vmatpush.bf16.msra.mxu0 %v199
    %213 = vmatpush.bf16.msra.mxu0 %v198
    %214 = vmatpush.bf16.msra.mxu0 %v197
    %215 = vmatpush.bf16.msra.mxu0 %v196
    %216 = vmatpush.bf16.msra.mxu0 %v195
    %217 = vmatpush.bf16.msra.mxu0 %v194
    %218 = vmatmul.bf16.gmra.mxu0 %v141
    %v219 = vpop.f32.mrf.mxu0
    %v220 = vadd.f32 %v160, %v219
    %v221 = vpop.f32.mrf.mxu0
    %222 = vdwg.mxu0
    %v223 = vmax.f32 %v220, 0.0
    %v224 = vpack.c.bf16 %v223, %v223
    %v225 = vld [vmem:[#allocation8] sm:$0xff]
    %v226 = vld [vmem:[#allocation8 + $0x8] sm:$0xff]
    %v227 = vld [vmem:[#allocation8 + $0x10] sm:$0xff]
    %v228 = vld [vmem:[#allocation8 + $0x18] sm:$0xff]
    %v229 = vld [vmem:[#allocation8 + $0x20] sm:$0xff]
    %v230 = vld [vmem:[#allocation8 + $0x28] sm:$0xff]
    %v231 = vld [vmem:[#allocation8 + $0x30] sm:$0xff]
    %v232 = vld [vmem:[#allocation8 + $0x38] sm:$0xff]
    %v233 = vld [vmem:[#allocation8 + $0x40] sm:$0xff]
    %v234 = vld [vmem:[#allocation8 + $0x48] sm:$0xff]
    %v235 = vld [vmem:[#allocation8 + $0x50] sm:$0xff]
    %v236 = vld [vmem:[#allocation8 + $0x58] sm:$0xff]
    %v237 = vld [vmem:[#allocation8 + $0x60] sm:$0xff]
    %v238 = vld [vmem:[#allocation8 + $0x68] sm:$0xff]
    %v239 = vld [vmem:[#allocation8 + $0x70] sm:$0xff]
    %v240 = vld [vmem:[#allocation8 + $0x78] sm:$0xff]
    %v241 = vld [vmem:[#allocation8 + $0x80] sm:$0xff]
    %v242 = vld [vmem:[#allocation8 + $0x88] sm:$0xff]
    %v243 = vld [vmem:[#allocation8 + $0x90] sm:$0xff]
    %v244 = vld [vmem:[#allocation8 + $0x98] sm:$0xff]
    %v245 = vld [vmem:[#allocation8 + $0xa0] sm:$0xff]
    %v246 = vld [vmem:[#allocation8 + $0xa8] sm:$0xff]
    %v247 = vld [vmem:[#allocation8 + $0xb0] sm:$0xff]
    %v248 = vld [vmem:[#allocation8 + $0xb8] sm:$0xff]
    %v249 = vld [vmem:[#allocation8 + $0xc0] sm:$0xff]
    %v250 = vld [vmem:[#allocation8 + $0xc8] sm:$0xff]
    %v251 = vld [vmem:[#allocation8 + $0xd0] sm:$0xff]
    %v252 = vld [vmem:[#allocation8 + $0xd8] sm:$0xff]
    %v253 = vld [vmem:[#allocation8 + $0xe0] sm:$0xff]
    %v254 = vld [vmem:[#allocation8 + $0xe8] sm:$0xff]
    %v255 = vld [vmem:[#allocation8 + $0xf0] sm:$0xff]
    %v256 = vld [vmem:[#allocation8 + $0xf8] sm:$0xff]
    %v257 = vld [vmem:[#allocation8 + $0x100] sm:$0xff]
    %v258 = vld [vmem:[#allocation8 + $0x108] sm:$0xff]
    %v259 = vld [vmem:[#allocation8 + $0x110] sm:$0xff]
    %v260 = vld [vmem:[#allocation8 + $0x118] sm:$0xff]
    %v261 = vld [vmem:[#allocation8 + $0x120] sm:$0xff]
    %v262 = vld [vmem:[#allocation8 + $0x128] sm:$0xff]
    %v263 = vld [vmem:[#allocation8 + $0x130] sm:$0xff]
    %v264 = vld [vmem:[#allocation8 + $0x138] sm:$0xff]
    %v265 = vld [vmem:[#allocation8 + $0x140] sm:$0xff]
    %v266 = vld [vmem:[#allocation8 + $0x148] sm:$0xff]
    %v267 = vld [vmem:[#allocation8 + $0x150] sm:$0xff]
    %v268 = vld [vmem:[#allocation8 + $0x158] sm:$0xff]
    %v269 = vld [vmem:[#allocation8 + $0x160] sm:$0xff]
    %v270 = vld [vmem:[#allocation8 + $0x168] sm:$0xff]
    %v271 = vld [vmem:[#allocation8 + $0x170] sm:$0xff]
    %v272 = vld [vmem:[#allocation8 + $0x178] sm:$0xff]
    %v273 = vld [vmem:[#allocation8 + $0x180] sm:$0xff]
    %v274 = vld [vmem:[#allocation8 + $0x188] sm:$0xff]
    %v275 = vld [vmem:[#allocation8 + $0x190] sm:$0xff]
    %v276 = vld [vmem:[#allocation8 + $0x198] sm:$0xff]
    %v277 = vld [vmem:[#allocation8 + $0x1a0] sm:$0xff]
    %v278 = vld [vmem:[#allocation8 + $0x1a8] sm:$0xff]
    %v279 = vld [vmem:[#allocation8 + $0x1b0] sm:$0xff]
    %v280 = vld [vmem:[#allocation8 + $0x1b8] sm:$0xff]
    %v281 = vld [vmem:[#allocation8 + $0x1c0] sm:$0xff]
    %v282 = vld [vmem:[#allocation8 + $0x1c8] sm:$0xff]
    %v283 = vld [vmem:[#allocation8 + $0x1d0] sm:$0xff]
    %v284 = vld [vmem:[#allocation8 + $0x1d8] sm:$0xff]
    %v285 = vld [vmem:[#allocation8 + $0x1e0] sm:$0xff]
    %v286 = vld [vmem:[#allocation8 + $0x1e8] sm:$0xff]
    %v287 = vld [vmem:[#allocation8 + $0x1f0] sm:$0xff]
    %v288 = vld [vmem:[#allocation8 + $0x1f8] sm:$0xff]
    %v289 = vld [vmem:[#allocation10] sm:$0xff]
    %v291 = vperm.slane %v289, 0
    %v292 = vperm.slane %v289, 1
    %v293 = vperm.slane %v289, 2
    %v294 = vperm.slane %v289, 3
    %v295 = vperm.slane %v289, 4
    %v296 = vperm.slane %v289, 5
    %v297 = vperm.slane %v289, 6
    %v298 = vperm.slane %v289, 7
    %v371 = vunpack.c.l.b16 %v225
    %v372 = vunpack.c.h.b16 %v225
    %v373 = vunpack.c.l.b16 %v226
    %v374 = vunpack.c.h.b16 %v226
    %v375 = vunpack.c.l.b16 %v227
    %v376 = vunpack.c.h.b16 %v227
    %v377 = vunpack.c.l.b16 %v228
    %v378 = vunpack.c.h.b16 %v228
    %v379 = vunpack.c.l.b16 %v229
    %v380 = vunpack.c.h.b16 %v229
    %v381 = vunpack.c.l.b16 %v230
    %v382 = vunpack.c.h.b16 %v230
    %v383 = vunpack.c.l.b16 %v231
    %v384 = vunpack.c.h.b16 %v231
    %v385 = vunpack.c.l.b16 %v232
    %v386 = vunpack.c.h.b16 %v232
    %v387 = vunpack.c.l.b16 %v233
    %v388 = vunpack.c.h.b16 %v233
    %v389 = vunpack.c.l.b16 %v234
    %v390 = vunpack.c.h.b16 %v234
    %v391 = vunpack.c.l.b16 %v235
    %v392 = vunpack.c.h.b16 %v235
    %v393 = vunpack.c.l.b16 %v236
    %v394 = vunpack.c.h.b16 %v236
    %v395 = vunpack.c.l.b16 %v237
    %v396 = vunpack.c.h.b16 %v237
    %v397 = vunpack.c.l.b16 %v238
    %v398 = vunpack.c.h.b16 %v238
    %v399 = vunpack.c.l.b16 %v239
    %v400 = vunpack.c.h.b16 %v239
    %v401 = vunpack.c.l.b16 %v240
    %v402 = vunpack.c.h.b16 %v240
    %v403 = vunpack.c.l.b16 %v241
    %v404 = vunpack.c.h.b16 %v241
    %v405 = vunpack.c.l.b16 %v242
    %v406 = vunpack.c.h.b16 %v242
    %v407 = vunpack.c.l.b16 %v243
    %v408 = vunpack.c.h.b16 %v243
    %v409 = vunpack.c.l.b16 %v244
    %v410 = vunpack.c.h.b16 %v244
    %v411 = vunpack.c.l.b16 %v245
    %v412 = vunpack.c.h.b16 %v245
    %v413 = vunpack.c.l.b16 %v246
    %v414 = vunpack.c.h.b16 %v246
    %v415 = vunpack.c.l.b16 %v247
    %v416 = vunpack.c.h.b16 %v247
    %v417 = vunpack.c.l.b16 %v248
    %v418 = vunpack.c.h.b16 %v248
    %v419 = vunpack.c.l.b16 %v249
    %v420 = vunpack.c.h.b16 %v249
    %v421 = vunpack.c.l.b16 %v250
    %v422 = vunpack.c.h.b16 %v250
    %v423 = vunpack.c.l.b16 %v251
    %v424 = vunpack.c.h.b16 %v251
    %v425 = vunpack.c.l.b16 %v252
    %v426 = vunpack.c.h.b16 %v252
    %v427 = vunpack.c.l.b16 %v253
    %v428 = vunpack.c.h.b16 %v253
    %v429 = vunpack.c.l.b16 %v254
    %v430 = vunpack.c.h.b16 %v254
    %v431 = vunpack.c.l.b16 %v255
    %v432 = vunpack.c.h.b16 %v255
    %v433 = vunpack.c.l.b16 %v256
    %v434 = vunpack.c.h.b16 %v256
    %v435 = vunpack.c.l.b16 %v257
    %v436 = vunpack.c.h.b16 %v257
    %v437 = vunpack.c.l.b16 %v258
    %v438 = vunpack.c.h.b16 %v258
    %v439 = vunpack.c.l.b16 %v259
    %v440 = vunpack.c.h.b16 %v259
    %v441 = vunpack.c.l.b16 %v260
    %v442 = vunpack.c.h.b16 %v260
    %v443 = vunpack.c.l.b16 %v261
    %v444 = vunpack.c.h.b16 %v261
    %v445 = vunpack.c.l.b16 %v262
    %v446 = vunpack.c.h.b16 %v262
    %v447 = vunpack.c.l.b16 %v263
    %v448 = vunpack.c.h.b16 %v263
    %v449 = vunpack.c.l.b16 %v264
    %v450 = vunpack.c.h.b16 %v264
    %v451 = vunpack.c.l.b16 %v265
    %v452 = vunpack.c.h.b16 %v265
    %v453 = vunpack.c.l.b16 %v266
    %v454 = vunpack.c.h.b16 %v266
    %v455 = vunpack.c.l.b16 %v267
    %v456 = vunpack.c.h.b16 %v267
    %v457 = vunpack.c.l.b16 %v268
    %v458 = vunpack.c.h.b16 %v268
    %v459 = vunpack.c.l.b16 %v269
    %v460 = vunpack.c.h.b16 %v269
    %v461 = vunpack.c.l.b16 %v270
    %v462 = vunpack.c.h.b16 %v270
    %v463 = vunpack.c.l.b16 %v271
    %v464 = vunpack.c.h.b16 %v271
    %v465 = vunpack.c.l.b16 %v272
    %v466 = vunpack.c.h.b16 %v272
    %v467 = vunpack.c.l.b16 %v273
    %v468 = vunpack.c.h.b16 %v273
    %v469 = vunpack.c.l.b16 %v274
    %v470 = vunpack.c.h.b16 %v274
    %v471 = vunpack.c.l.b16 %v275
    %v472 = vunpack.c.h.b16 %v275
    %v473 = vunpack.c.l.b16 %v276
    %v474 = vunpack.c.h.b16 %v276
    %v475 = vunpack.c.l.b16 %v277
    %v476 = vunpack.c.h.b16 %v277
    %v477 = vunpack.c.l.b16 %v278
    %v478 = vunpack.c.h.b16 %v278
    %v479 = vunpack.c.l.b16 %v279
    %v480 = vunpack.c.h.b16 %v279
    %v481 = vunpack.c.l.b16 %v280
    %v482 = vunpack.c.h.b16 %v280
    %v483 = vunpack.c.l.b16 %v281
    %v484 = vunpack.c.h.b16 %v281
    %v485 = vunpack.c.l.b16 %v282
    %v486 = vunpack.c.h.b16 %v282
    %v487 = vunpack.c.l.b16 %v283
    %v488 = vunpack.c.h.b16 %v283
    %v489 = vunpack.c.l.b16 %v284
    %v490 = vunpack.c.h.b16 %v284
    %v491 = vunpack.c.l.b16 %v285
    %v492 = vunpack.c.h.b16 %v285
    %v493 = vunpack.c.l.b16 %v286
    %v494 = vunpack.c.h.b16 %v286
    %v495 = vunpack.c.l.b16 %v287
    %v496 = vunpack.c.h.b16 %v287
    %v497 = vunpack.c.l.b16 %v288
    %v498 = vunpack.c.h.b16 %v288
    %v499 = vpack.c.b16 %v379, %v371
    %v500 = vpack.c.b16 %v380, %v372
    %v501 = vpack.c.b16 %v381, %v373
    %v502 = vpack.c.b16 %v382, %v374
    %v503 = vpack.c.b16 %v383, %v375
    %v504 = vpack.c.b16 %v384, %v376
    %v505 = vpack.c.b16 %v385, %v377
    %v506 = vpack.c.b16 %v386, %v378
    %v507 = vpack.c.b16 %v395, %v387
    %v508 = vpack.c.b16 %v396, %v388
    %v509 = vpack.c.b16 %v397, %v389
    %v510 = vpack.c.b16 %v398, %v390
    %v511 = vpack.c.b16 %v399, %v391
    %v512 = vpack.c.b16 %v400, %v392
    %v513 = vpack.c.b16 %v401, %v393
    %v514 = vpack.c.b16 %v402, %v394
    %v515 = vpack.c.b16 %v411, %v403
    %v516 = vpack.c.b16 %v412, %v404
    %v517 = vpack.c.b16 %v413, %v405
    %v518 = vpack.c.b16 %v414, %v406
    %v519 = vpack.c.b16 %v415, %v407
    %v520 = vpack.c.b16 %v416, %v408
    %v521 = vpack.c.b16 %v417, %v409
    %v522 = vpack.c.b16 %v418, %v410
    %v523 = vpack.c.b16 %v427, %v419
    %v524 = vpack.c.b16 %v428, %v420
    %v525 = vpack.c.b16 %v429, %v421
    %v526 = vpack.c.b16 %v430, %v422
    %v527 = vpack.c.b16 %v431, %v423
    %v528 = vpack.c.b16 %v432, %v424
    %v529 = vpack.c.b16 %v433, %v425
    %v530 = vpack.c.b16 %v434, %v426
    %v531 = vpack.c.b16 %v443, %v435
    %v532 = vpack.c.b16 %v444, %v436
    %v533 = vpack.c.b16 %v445, %v437
    %v534 = vpack.c.b16 %v446, %v438
    %v535 = vpack.c.b16 %v447, %v439
    %v536 = vpack.c.b16 %v448, %v440
    %v537 = vpack.c.b16 %v449, %v441
    %v538 = vpack.c.b16 %v450, %v442
    %v539 = vpack.c.b16 %v459, %v451
    %v540 = vpack.c.b16 %v460, %v452
    %v541 = vpack.c.b16 %v461, %v453
    %v542 = vpack.c.b16 %v462, %v454
    %v543 = vpack.c.b16 %v463, %v455
    %v544 = vpack.c.b16 %v464, %v456
    %v545 = vpack.c.b16 %v465, %v457
    %v546 = vpack.c.b16 %v466, %v458
    %v547 = vpack.c.b16 %v475, %v467
    %v548 = vpack.c.b16 %v476, %v468
    %v549 = vpack.c.b16 %v477, %v469
    %v550 = vpack.c.b16 %v478, %v470
    %v551 = vpack.c.b16 %v479, %v471
    %v552 = vpack.c.b16 %v480, %v472
    %v553 = vpack.c.b16 %v481, %v473
    %v554 = vpack.c.b16 %v482, %v474
    %v555 = vpack.c.b16 %v491, %v483
    %v556 = vpack.c.b16 %v492, %v484
    %v557 = vpack.c.b16 %v493, %v485
    %v558 = vpack.c.b16 %v494, %v486
    %v559 = vpack.c.b16 %v495, %v487
    %v560 = vpack.c.b16 %v496, %v488
    %v561 = vpack.c.b16 %v497, %v489
    %v562 = vpack.c.b16 %v498, %v490
    %627 = vmatpush.bf16.msra.mxu0 %v555
    %628 = vmatpush.bf16.msra.mxu0 %v547
    %629 = vmatpush.bf16.msra.mxu0 %v539
    %630 = vmatpush.bf16.msra.mxu0 %v531
    %631 = vmatpush.bf16.msra.mxu0 %v523
    %632 = vmatpush.bf16.msra.mxu0 %v515
    %633 = vmatpush.bf16.msra.mxu0 %v507
    %634 = vmatpush.bf16.msra.mxu0 %v499
    %635 = vmatmul.bf16.gmra.mxu0 %v224
    %v636 = vpop.f32.mrf.mxu0
    %v637 = vadd.f32 %v291, %v636
    %v638 = vpop.f32.mrf.mxu0
    %639 = vdwg.mxu0
    %640 = vmatpush.bf16.msra.mxu0 %v556
    %641 = vmatpush.bf16.msra.mxu0 %v548
    %642 = vmatpush.bf16.msra.mxu0 %v540
    %643 = vmatpush.bf16.msra.mxu0 %v532
    %644 = vmatpush.bf16.msra.mxu0 %v524
    %645 = vmatpush.bf16.msra.mxu0 %v516
    %646 = vmatpush.bf16.msra.mxu0 %v508
    %647 = vmatpush.bf16.msra.mxu0 %v500
    %648 = vmatmul.bf16.gmra.mxu0 %v224
    %v649 = vpop.f32.mrf.mxu0
    %v650 = vadd.f32 %v292, %v649
    %v651 = vpop.f32.mrf.mxu0
    %652 = vdwg.mxu0
    %653 = vmatpush.bf16.msra.mxu0 %v557
    %654 = vmatpush.bf16.msra.mxu0 %v549
    %655 = vmatpush.bf16.msra.mxu0 %v541
    %656 = vmatpush.bf16.msra.mxu0 %v533
    %657 = vmatpush.bf16.msra.mxu0 %v525
    %658 = vmatpush.bf16.msra.mxu0 %v517
    %659 = vmatpush.bf16.msra.mxu0 %v509
    %660 = vmatpush.bf16.msra.mxu0 %v501
    %661 = vmatmul.bf16.gmra.mxu0 %v224
    %v662 = vpop.f32.mrf.mxu0
    %v663 = vadd.f32 %v293, %v662
    %v664 = vpop.f32.mrf.mxu0
    %665 = vdwg.mxu0
    %666 = vmatpush.bf16.msra.mxu0 %v558
    %667 = vmatpush.bf16.msra.mxu0 %v550
    %668 = vmatpush.bf16.msra.mxu0 %v542
    %669 = vmatpush.bf16.msra.mxu0 %v534
    %670 = vmatpush.bf16.msra.mxu0 %v526
    %671 = vmatpush.bf16.msra.mxu0 %v518
    %672 = vmatpush.bf16.msra.mxu0 %v510
    %673 = vmatpush.bf16.msra.mxu0 %v502
    %674 = vmatmul.bf16.gmra.mxu0 %v224
    %v675 = vpop.f32.mrf.mxu0
    %v676 = vadd.f32 %v294, %v675
    %v677 = vpop.f32.mrf.mxu0
    %678 = vdwg.mxu0
    %679 = vmatpush.bf16.msra.mxu0 %v559
    %680 = vmatpush.bf16.msra.mxu0 %v551
    %681 = vmatpush.bf16.msra.mxu0 %v543
    %682 = vmatpush.bf16.msra.mxu0 %v535
    %683 = vmatpush.bf16.msra.mxu0 %v527
    %684 = vmatpush.bf16.msra.mxu0 %v519
    %685 = vmatpush.bf16.msra.mxu0 %v511
    %686 = vmatpush.bf16.msra.mxu0 %v503
    %687 = vmatmul.bf16.gmra.mxu0 %v224
    %v688 = vpop.f32.mrf.mxu0
    %v689 = vadd.f32 %v295, %v688
    %v690 = vpop.f32.mrf.mxu0
    %691 = vdwg.mxu0
    %692 = vmatpush.bf16.msra.mxu0 %v560
    %693 = vmatpush.bf16.msra.mxu0 %v552
    %694 = vmatpush.bf16.msra.mxu0 %v544
    %695 = vmatpush.bf16.msra.mxu0 %v536
    %696 = vmatpush.bf16.msra.mxu0 %v528
    %697 = vmatpush.bf16.msra.mxu0 %v520
    %698 = vmatpush.bf16.msra.mxu0 %v512
    %699 = vmatpush.bf16.msra.mxu0 %v504
    %700 = vmatmul.bf16.gmra.mxu0 %v224
    %v701 = vpop.f32.mrf.mxu0
    %v702 = vadd.f32 %v296, %v701
    %v703 = vpop.f32.mrf.mxu0
    %704 = vdwg.mxu0
    %705 = vmatpush.bf16.msra.mxu0 %v561
    %706 = vmatpush.bf16.msra.mxu0 %v553
    %707 = vmatpush.bf16.msra.mxu0 %v545
    %708 = vmatpush.bf16.msra.mxu0 %v537
    %709 = vmatpush.bf16.msra.mxu0 %v529
    %710 = vmatpush.bf16.msra.mxu0 %v521
    %711 = vmatpush.bf16.msra.mxu0 %v513
    %712 = vmatpush.bf16.msra.mxu0 %v505
    %713 = vmatmul.bf16.gmra.mxu0 %v224
    %v714 = vpop.f32.mrf.mxu0
    %v715 = vadd.f32 %v297, %v714
    %v716 = vpop.f32.mrf.mxu0
    %717 = vdwg.mxu0
    %718 = vmatpush.bf16.msra.mxu0 %v562
    %719 = vmatpush.bf16.msra.mxu0 %v554
    %720 = vmatpush.bf16.msra.mxu0 %v546
    %721 = vmatpush.bf16.msra.mxu0 %v538
    %722 = vmatpush.bf16.msra.mxu0 %v530
    %723 = vmatpush.bf16.msra.mxu0 %v522
    %724 = vmatpush.bf16.msra.mxu0 %v514
    %725 = vmatpush.bf16.msra.mxu0 %v506
    %726 = vmatmul.bf16.gmra.mxu0 %v224
    %v727 = vpop.f32.mrf.mxu0
    %v728 = vadd.f32 %v298, %v727
    %v729 = vpop.f32.mrf.mxu0
    %730 = vdwg.mxu0
    %v731 = vxor.u32 %v637, 2147483648
    %v732 = vxor.u32 %v650, 2147483648
    %v733 = vxor.u32 %v663, 2147483648
    %v734 = vxor.u32 %v676, 2147483648
    %v735 = vxor.u32 %v689, 2147483648
    %v736 = vxor.u32 %v702, 2147483648
    %v737 = vxor.u32 %v715, 2147483648
    %v738 = vxor.u32 %v728, 2147483648
    %v739 = vmul.f32 %v731, 1.442695
    %v740 = vpow.pop %v739
    %v741 = vmul.f32 %v732, 1.442695
    %v742 = vpow.pop %v741
    %v743 = vmul.f32 %v733, 1.442695
    %v744 = vpow.pop %v743
    %v745 = vmul.f32 %v734, 1.442695
    %v746 = vpow.pop %v745
    %v747 = vmul.f32 %v735, 1.442695
    %v748 = vpow.pop %v747
    %v749 = vmul.f32 %v736, 1.442695
    %v750 = vpow.pop %v749
    %v751 = vmul.f32 %v737, 1.442695
    %v752 = vpow.pop %v751
    %v753 = vmul.f32 %v738, 1.442695
    %v754 = vpow.pop %v753
    %v755 = vadd.f32 %v740, 1.0
    %v756 = vadd.f32 %v742, 1.0
    %v757 = vadd.f32 %v744, 1.0
    %v758 = vadd.f32 %v746, 1.0
    %v759 = vadd.f32 %v748, 1.0
    %v760 = vadd.f32 %v750, 1.0
    %v761 = vadd.f32 %v752, 1.0
    %v762 = vadd.f32 %v754, 1.0
    %v763 = vrcp.pop %v755
    %v764 = vmul.f32 %v755, %v763
    %v765 = vsub.f32 1.0, %v764
    %v766 = vmul.f32 %v763, %v765
    %v767 = vadd.f32 %v763, %v766
    %vm768 = vweird.f32 %v755
    %vm769 = vweird.f32 %v763
    %vm770 = vmor %vm768, %vm769
    %v771 = vsel %vm770, %v763, %v767
    %v772 = vand.u32 2147483647, %v755
    %vm773 = vcmp.eq.f32.partialorder %v772, 8.507059e+37
    %v774 = vand.u32 %v755, 2147483648
    %v775 = vor.u32 1.1754944e-38, %v774
    %v776 = vsel %vm773, %v775, %v771
    %v777 = vmul.f32 1.0, %v776
    %v778 = vrcp.pop %v756
    %v779 = vmul.f32 %v756, %v778
    %v780 = vsub.f32 1.0, %v779
    %v781 = vmul.f32 %v778, %v780
    %v782 = vadd.f32 %v778, %v781
    %vm783 = vweird.f32 %v756
    %vm784 = vweird.f32 %v778
    %vm785 = vmor %vm783, %vm784
    %v786 = vsel %vm785, %v778, %v782
    %v787 = vand.u32 2147483647, %v756
    %vm788 = vcmp.eq.f32.partialorder %v787, 8.507059e+37
    %v789 = vand.u32 %v756, 2147483648
    %v790 = vor.u32 1.1754944e-38, %v789
    %v791 = vsel %vm788, %v790, %v786
    %v792 = vmul.f32 1.0, %v791
    %v793 = vrcp.pop %v757
    %v794 = vmul.f32 %v757, %v793
    %v795 = vsub.f32 1.0, %v794
    %v796 = vmul.f32 %v793, %v795
    %v797 = vadd.f32 %v793, %v796
    %vm798 = vweird.f32 %v757
    %vm799 = vweird.f32 %v793
    %vm800 = vmor %vm798, %vm799
    %v801 = vsel %vm800, %v793, %v797
    %v802 = vand.u32 2147483647, %v757
    %vm803 = vcmp.eq.f32.partialorder %v802, 8.507059e+37
    %v804 = vand.u32 %v757, 2147483648
    %v805 = vor.u32 1.1754944e-38, %v804
    %v806 = vsel %vm803, %v805, %v801
    %v807 = vmul.f32 1.0, %v806
    %v808 = vrcp.pop %v758
    %v809 = vmul.f32 %v758, %v808
    %v810 = vsub.f32 1.0, %v809
    %v811 = vmul.f32 %v808, %v810
    %v812 = vadd.f32 %v808, %v811
    %vm813 = vweird.f32 %v758
    %vm814 = vweird.f32 %v808
    %vm815 = vmor %vm813, %vm814
    %v816 = vsel %vm815, %v808, %v812
    %v817 = vand.u32 2147483647, %v758
    %vm818 = vcmp.eq.f32.partialorder %v817, 8.507059e+37
    %v819 = vand.u32 %v758, 2147483648
    %v820 = vor.u32 1.1754944e-38, %v819
    %v821 = vsel %vm818, %v820, %v816
    %v822 = vmul.f32 1.0, %v821
    %v823 = vrcp.pop %v759
    %v824 = vmul.f32 %v759, %v823
    %v825 = vsub.f32 1.0, %v824
    %v826 = vmul.f32 %v823, %v825
    %v827 = vadd.f32 %v823, %v826
    %vm828 = vweird.f32 %v759
    %vm829 = vweird.f32 %v823
    %vm830 = vmor %vm828, %vm829
    %v831 = vsel %vm830, %v823, %v827
    %v832 = vand.u32 2147483647, %v759
    %vm833 = vcmp.eq.f32.partialorder %v832, 8.507059e+37
    %v834 = vand.u32 %v759, 2147483648
    %v835 = vor.u32 1.1754944e-38, %v834
    %v836 = vsel %vm833, %v835, %v831
    %v837 = vmul.f32 1.0, %v836
    %v838 = vrcp.pop %v760
    %v839 = vmul.f32 %v760, %v838
    %v840 = vsub.f32 1.0, %v839
    %v841 = vmul.f32 %v838, %v840
    %v842 = vadd.f32 %v838, %v841
    %vm843 = vweird.f32 %v760
    %vm844 = vweird.f32 %v838
    %vm845 = vmor %vm843, %vm844
    %v846 = vsel %vm845, %v838, %v842
    %v847 = vand.u32 2147483647, %v760
    %vm848 = vcmp.eq.f32.partialorder %v847, 8.507059e+37
    %v849 = vand.u32 %v760, 2147483648
    %v850 = vor.u32 1.1754944e-38, %v849
    %v851 = vsel %vm848, %v850, %v846
    %v852 = vmul.f32 1.0, %v851
    %v853 = vrcp.pop %v761
    %v854 = vmul.f32 %v761, %v853
    %v855 = vsub.f32 1.0, %v854
    %v856 = vmul.f32 %v853, %v855
    %v857 = vadd.f32 %v853, %v856
    %vm858 = vweird.f32 %v761
    %vm859 = vweird.f32 %v853
    %vm860 = vmor %vm858, %vm859
    %v861 = vsel %vm860, %v853, %v857
    %v862 = vand.u32 2147483647, %v761
    %vm863 = vcmp.eq.f32.partialorder %v862, 8.507059e+37
    %v864 = vand.u32 %v761, 2147483648
    %v865 = vor.u32 1.1754944e-38, %v864
    %v866 = vsel %vm863, %v865, %v861
    %v867 = vmul.f32 1.0, %v866
    %v868 = vrcp.pop %v762
    %v869 = vmul.f32 %v762, %v868
    %v870 = vsub.f32 1.0, %v869
    %v871 = vmul.f32 %v868, %v870
    %v872 = vadd.f32 %v868, %v871
    %vm873 = vweird.f32 %v762
    %vm874 = vweird.f32 %v868
    %vm875 = vmor %vm873, %vm874
    %v876 = vsel %vm875, %v868, %v872
    %v877 = vand.u32 2147483647, %v762
    %vm878 = vcmp.eq.f32.partialorder %v877, 8.507059e+37
    %v879 = vand.u32 %v762, 2147483648
    %v880 = vor.u32 1.1754944e-38, %v879
    %v881 = vsel %vm878, %v880, %v876
    %v882 = vmul.f32 1.0, %v881
    %883 = vst [vmem:[#allocation11] sm:$0xff] %v777
    %884 = vst [vmem:[#allocation11 + $0x8] sm:$0xff] %v792
    %885 = vst [vmem:[#allocation11 + $0x10] sm:$0xff] %v807
    %886 = vst [vmem:[#allocation11 + $0x18] sm:$0xff] %v822
    %887 = vst [vmem:[#allocation11 + $0x20] sm:$0xff] %v837
    %888 = vst [vmem:[#allocation11 + $0x28] sm:$0xff] %v852
    %889 = vst [vmem:[#allocation11 + $0x30] sm:$0xff] %v867
    %890 = vst [vmem:[#allocation11 + $0x38] sm:$0xff] %v882
    // Predicated region
    $region50: #{tpu_custom_call.1} parent=1 // pred_check
      _
    $region51: #{tpu_custom_call.1} parent=1 // pred_check_branch
      %892 = sbr.rel (0) target = $region53
    $region52: #{tpu_custom_call.1} parent=1 // pred_region
      %894 = vsyncadd [#allocation4], 0
      %s896 = sshll.u32 [#allocation11], 4
      %s897 = int_to_ptr.vmem [resolvable:$true] %s896
      %s898 = sshll.u32 %s7, 4
      %s899 = int_to_ptr.hbm [resolvable:$true] %s898
      %901 = dma.vmem_to_hbm [thread:$0]  %s897, 1024, %s899, [#allocation4]
    $region53: #{tpu_custom_call.1} parent=1 // pred_fallthru
      _
    // Predicated region
    $region54: #{tpu_custom_call.1} parent=1 // pred_check
      _
    $region55: #{tpu_custom_call.1} parent=1 // pred_check_branch
      %903 = sbr.rel (0) target = $region57
    $region56: #{tpu_custom_call.1} parent=1 // pred_region
      %905 = dma.done [#allocation4], 1024
    $region57: #{tpu_custom_call.1} parent=1 // pred_fallthru
      _
    %906 = vsyncpa [#allocation3], 1
    %907 = vsyncpa [#allocation6], 1
    %908 = vsyncpa [#allocation9], 1
    %909 = vsyncpa [#allocation4], 1

</llo_original>
